<compile_context>
chip_gen: v6e
topology: v6e:2x2x1
jax: 0.10.0
libtpu: 0.0.40
codegen_flags: <defaults>
</compile_context>

<pallas_src>
import jax
import jax.numpy as jnp
from jax.experimental import pallas as pl
from jax.experimental.pallas import tpu as pltpu
import numpy as np


def _round_up(x, m):
    return ((x + m - 1) // m) * m


def mlp_head_kernel(x_ref, w1_ref, b1_ref, w2_ref, b2_ref, o_ref):
    # x/w1/w2 are bf16, biases f32.  MXU accumulates in f32; bias + ReLU on VPU.
    x = x_ref[...]
    h = jnp.dot(x, w1_ref[...], preferred_element_type=jnp.float32)
    h = jnp.maximum(h + b1_ref[...], 0.0)
    y = jnp.dot(h.astype(w2_ref.dtype), w2_ref[...],
                preferred_element_type=jnp.float32)
    y = jnp.maximum(y + b2_ref[...], 0.0)
    # TODO(synk): dropout is identity at inference; training-mode dropout would
    # use pltpu.prng_seed + pltpu.prng_random_bits to build a keep-mask.
    o_ref[...] = y.astype(o_ref.dtype)


def tembed_div_pred_head(x, w1, b1, w2, b2, *, tb=256):
    """Fused fc1 -> ReLU -> fc2 -> ReLU head.

    x:  [B, in_f] f32,  w1: [in_f, hid],  b1: [1, hid],
    w2: [hid, out_f],  b2: [1, out_f]  ->  [B, out_f] f32.

    Notes:
      * Weights/biases use constant index_maps, so Pallas DMAs them only once.
        At larger in_f/hid they could additionally be single-buffered via
        pipeline_mode=pl.Buffered(1); at these shapes (a few KB) the default
        double-buffer allocation is negligible, so we keep the default.
      * On v7x keep B large enough that the grid has >= 2 steps (tb=256 gives
        that for any B >= 512) so "parallel" shards across both TensorCores.
      * K = in_f (32) / hid (64) inherently underfills the MXU contraction dim;
        the real win at scale is fusing this head into the producing layer's
        kernel rather than tuning it in isolation.
    """
    B, in_f = x.shape
    hid = w1.shape[1]
    out_f = w2.shape[1]
    assert w1.shape[0] == in_f and w2.shape[0] == hid
    assert b1.shape == (1, hid) and b2.shape == (1, out_f)

    # --- batch tiling: sublane-aligned tb, clamped to the (8-padded) batch.
    tb = max(8, min(_round_up(tb, 8), _round_up(B, 8)))
    b_pad = _round_up(B, tb)
    n_steps = b_pad // tb

    # --- lane-dense output: pad out_f up to a multiple of 128 lanes.
    out_p = _round_up(out_f, 128)

    # --- wrapper-side padding / dtype plumbing (cheap XLA ops).
    x_in = x
    if b_pad != B:
        x_in = jnp.pad(x_in, ((0, b_pad - B), (0, 0)))
    x_in = x_in.astype(jnp.bfloat16)
    w1_in = w1.astype(jnp.bfloat16)
    b1_in = b1.astype(jnp.float32)
    w2_in = w2
    b2_in = b2.astype(jnp.float32)
    if out_p != out_f:
        w2_in = jnp.pad(w2_in, ((0, 0), (0, out_p - out_f)))
        b2_in = jnp.pad(b2_in, ((0, 0), (0, out_p - out_f)))
    w2_in = w2_in.astype(jnp.bfloat16)

    # --- explicit VMEM budget (also valid under v7x's 64 MiB VMEM).
    def _padded_bytes(shape, itemsize):
        return _round_up(shape[0], 8) * _round_up(shape[1], 128) * itemsize

    resident = 2 * (_padded_bytes((in_f, hid), 2) + _padded_bytes((1, hid), 4)
                    + _padded_bytes((hid, out_p), 2) + _padded_bytes((1, out_p), 4))
    streaming = 2 * (_padded_bytes((tb, in_f), 2) + _padded_bytes((tb, out_p), 4))
    temporaries = (_padded_bytes((tb, hid), 4) + _padded_bytes((tb, hid), 2)
                   + _padded_bytes((tb, out_p), 4))
    est = resident + streaming + temporaries
    vmem_limit = int(min(64 * 1024 * 1024,
                         max(16 * 1024 * 1024, 2 * est + 2 * 1024 * 1024)))

    out = pl.pallas_call(
        mlp_head_kernel,
        out_shape=jax.ShapeDtypeStruct((b_pad, out_p), jnp.float32),
        grid_spec=pltpu.PrefetchScalarGridSpec(
            num_scalar_prefetch=0,
            grid=(n_steps,),
            in_specs=[
                pl.BlockSpec((tb, in_f), lambda i: (i, 0)),    # x tile over batch
                pl.BlockSpec((in_f, hid), lambda i: (0, 0)),   # W1 (resident)
                pl.BlockSpec((1, hid), lambda i: (0, 0)),      # b1 (resident)
                pl.BlockSpec((hid, out_p), lambda i: (0, 0)),  # W2 (resident, N padded)
                pl.BlockSpec((1, out_p), lambda i: (0, 0)),    # b2 (resident, N padded)
            ],
            out_specs=pl.BlockSpec((tb, out_p), lambda i: (i, 0)),
        ),
        compiler_params=pltpu.CompilerParams(
            dimension_semantics=("parallel",),
            vmem_limit_bytes=vmem_limit,
        ),
    )(x_in, w1_in, b1_in, w2_in, b2_in)

    # Drop the batch / lane padding.
    return out[:B, :out_f]


def reference(x, w1, b1, w2, b2):
    # Mirrors the kernel's arithmetic: bf16 matmul inputs, f32 accumulation.
    xb = x.astype(jnp.bfloat16).astype(jnp.float32)
    w1b = w1.astype(jnp.bfloat16).astype(jnp.float32)
    w2b = w2.astype(jnp.bfloat16).astype(jnp.float32)
    h = jnp.maximum(xb @ w1b + b1, 0.0)
    hb = h.astype(jnp.bfloat16).astype(jnp.float32)
    return jnp.maximum(hb @ w2b + b2, 0.0)


if __name__ == "__main__":
    in_features, hidden_features, out_features = 32, 64, 16

    key = jax.random.PRNGKey(0)
    k_x, k_w1, k_b1, k_w2, k_b2, k_x2 = jax.random.split(key, 6)

    # Deterministic params (PyTorch Linear stores [out,in]; we keep [in,out]).
    bound1 = 1.0 / np.sqrt(in_features)
    w1 = jax.random.uniform(k_w1, (in_features, hidden_features),
                            minval=-bound1, maxval=bound1, dtype=jnp.float32)
    b1 = jax.random.uniform(k_b1, (1, hidden_features),
                            minval=-bound1, maxval=bound1, dtype=jnp.float32)
    bound2 = 1.0 / np.sqrt(hidden_features)
    w2 = jax.random.uniform(k_w2, (hidden_features, out_features),
                            minval=-bound2, maxval=bound2, dtype=jnp.float32)
    b2 = jax.random.uniform(k_b2, (1, out_features),
                            minval=-bound2, maxval=bound2, dtype=jnp.float32)

    # Case 1: tiny batch (module-sized) -> collapses to a single grid step.
    x_small = jax.random.normal(k_x, (8, in_features), dtype=jnp.float32)
    out_small = jax.block_until_ready(tembed_div_pred_head(x_small, w1, b1, w2, b2))
    np.testing.assert_allclose(np.asarray(out_small),
                               np.asarray(reference(x_small, w1, b1, w2, b2)),
                               rtol=1e-3, atol=1e-3)

    # Case 2: batch not a multiple of the tile -> exercises cdiv grid,
    # batch padding, multi-step pipeline, and output-lane padding/slicing.
    x_big = jax.random.normal(k_x2, (200, in_features), dtype=jnp.float32)
    out_big = jax.block_until_ready(
        tembed_div_pred_head(x_big, w1, b1, w2, b2, tb=64))
    np.testing.assert_allclose(np.asarray(out_big),
                               np.asarray(reference(x_big, w1, b1, w2, b2)),
                               rtol=1e-3, atol=1e-3)

    print("KERNEL_OK")
</pallas_src>

<mosaic_0001>
module attributes {stable_mosaic.version = 11 : i64} {
  func.func @mlp_head_kernel(%arg0: i32, %arg1: memref<8x32xbf16, #tpu.memory_space<vmem>>, %arg2: memref<32x64xbf16, #tpu.memory_space<vmem>>, %arg3: memref<1x64xf32, #tpu.memory_space<vmem>>, %arg4: memref<64x128xbf16, #tpu.memory_space<vmem>>, %arg5: memref<1x128xf32, #tpu.memory_space<vmem>>, %arg6: memref<8x128xf32, #tpu.memory_space<vmem>>) attributes {dimension_semantics = [#tpu.dimension_semantics<parallel>], iteration_bounds = array<i64: 1>, scalar_prefetch = 0 : i64, scratch_operands = 0 : i64, tpu.core_type = #tpu.core_type<tc>, window_params = [{transform_indices = @transform_0, window_bounds = array<i64: 8, 32>}, {pipeline_mode = #tpu.pipeline_mode<synchronous>, transform_indices = @transform_1, window_bounds = array<i64: 32, 64>}, {pipeline_mode = #tpu.pipeline_mode<synchronous>, transform_indices = @transform_2, window_bounds = array<i64: 1, 64>}, {pipeline_mode = #tpu.pipeline_mode<synchronous>, transform_indices = @transform_3, window_bounds = array<i64: 64, 128>}, {pipeline_mode = #tpu.pipeline_mode<synchronous>, transform_indices = @transform_4, window_bounds = array<i64: 1, 128>}, {transform_indices = @transform_5, window_bounds = array<i64: 8, 128>}]} {
    %c0 = arith.constant 0 : index
    %c0_0 = arith.constant 0 : index
    %0 = vector.load %arg1[%c0, %c0_0] : memref<8x32xbf16, #tpu.memory_space<vmem>>, vector<8x32xbf16>
    %c0_1 = arith.constant 0 : index
    %c0_2 = arith.constant 0 : index
    %1 = vector.load %arg2[%c0_1, %c0_2] : memref<32x64xbf16, #tpu.memory_space<vmem>>, vector<32x64xbf16>
    %cst = arith.constant dense<0.000000e+00> : vector<8x64xf32>
    %2 = tpu.matmul %0, %1, %cst {dimension_numbers = #tpu.dot_dimension_numbers<[1], [0], [0], [1], [0, 0, 1, 1], [], []>} : vector<8x32xbf16>, vector<32x64xbf16>, vector<8x64xf32> -> vector<8x64xf32>
    %c0_3 = arith.constant 0 : index
    %c0_4 = arith.constant 0 : index
    %3 = vector.load %arg3[%c0_3, %c0_4] : memref<1x64xf32, #tpu.memory_space<vmem>>, vector<1x64xf32>
    %4 = vector.broadcast %3 : vector<1x64xf32> to vector<8x64xf32>
    %5 = arith.addf %2, %4 : vector<8x64xf32>
    %cst_5 = arith.constant 0.000000e+00 : f32
    %6 = vector.broadcast %cst_5 : f32 to vector<8x64xf32>
    %7 = arith.maximumf %5, %6 : vector<8x64xf32>
    %8 = arith.truncf %7 : vector<8x64xf32> to vector<8x64xbf16>
    %c0_6 = arith.constant 0 : index
    %c0_7 = arith.constant 0 : index
    %9 = vector.load %arg4[%c0_6, %c0_7] : memref<64x128xbf16, #tpu.memory_space<vmem>>, vector<64x128xbf16>
    %cst_8 = arith.constant dense<0.000000e+00> : vector<8x128xf32>
    %10 = tpu.matmul %8, %9, %cst_8 {dimension_numbers = #tpu.dot_dimension_numbers<[1], [0], [0], [1], [0, 0, 1, 1], [], []>} : vector<8x64xbf16>, vector<64x128xbf16>, vector<8x128xf32> -> vector<8x128xf32>
    %c0_9 = arith.constant 0 : index
    %c0_10 = arith.constant 0 : index
    %11 = vector.load %arg5[%c0_9, %c0_10] : memref<1x128xf32, #tpu.memory_space<vmem>>, vector<1x128xf32>
    %12 = vector.broadcast %11 : vector<1x128xf32> to vector<8x128xf32>
    %13 = arith.addf %10, %12 : vector<8x128xf32>
    %cst_11 = arith.constant 0.000000e+00 : f32
    %14 = vector.broadcast %cst_11 : f32 to vector<8x128xf32>
    %15 = arith.maximumf %13, %14 : vector<8x128xf32>
    %c0_12 = arith.constant 0 : index
    %c0_13 = arith.constant 0 : index
    %16 = vector.load %arg6[%c0_12, %c0_13] : memref<8x128xf32, #tpu.memory_space<vmem>>, vector<8x128xf32>
    tpu.vector_store %arg6[%c0_12, %c0_13], %15 {strides = array<i32>} : memref<8x128xf32, #tpu.memory_space<vmem>>, vector<8x128xf32>,
    return
  }
  func.func @transform_0(%arg0: i32) -> (i32, i32) {
    %c0_i32 = arith.constant 0 : i32
    %c0_i32_0 = arith.constant 0 : i32
    return %arg0, %c0_i32 : i32, i32
  }
  func.func @transform_1(%arg0: i32) -> (i32, i32) {
    %c0_i32 = arith.constant 0 : i32
    %c0_i32_0 = arith.constant 0 : i32
    %c0_i32_1 = arith.constant 0 : i32
    return %c0_i32, %c0_i32_0 : i32, i32
  }
  func.func @transform_2(%arg0: i32) -> (i32, i32) {
    %c0_i32 = arith.constant 0 : i32
    %c0_i32_0 = arith.constant 0 : i32
    %c0_i32_1 = arith.constant 0 : i32
    return %c0_i32, %c0_i32_0 : i32, i32
  }
  func.func @transform_3(%arg0: i32) -> (i32, i32) {
    %c0_i32 = arith.constant 0 : i32
    %c0_i32_0 = arith.constant 0 : i32
    %c0_i32_1 = arith.constant 0 : i32
    return %c0_i32, %c0_i32_0 : i32, i32
  }
  func.func @transform_4(%arg0: i32) -> (i32, i32) {
    %c0_i32 = arith.constant 0 : i32
    %c0_i32_0 = arith.constant 0 : i32
    %c0_i32_1 = arith.constant 0 : i32
    return %c0_i32, %c0_i32_0 : i32, i32
  }
  func.func @transform_5(%arg0: i32) -> (i32, i32) {
    %c0_i32 = arith.constant 0 : i32
    %c0_i32_0 = arith.constant 0 : i32
    return %arg0, %c0_i32 : i32, i32
  }
}

</mosaic_0001>

<llo_original>
// kernel: tpu_custom_call.1
$region0: #{tpu_custom_call.1}
  #allocation0 [shape = 'u32[]', space=smem, size = 0x4, offset = 0x4, fixed_abs, tag = 'smem constant byte address 0x4 - core index']
  #allocation1 [shape = 'u32[144,128]{1,0:T(1,128)}', space=vmem, size = 0x12000, scoped, tag = 'internal scratch']
  %s0 = inlined_call_operand.hbm [shape: bf16[8,32], index: 0, kind: input, shape index: {}]
  %s1 = inlined_call_operand.hbm [shape: bf16[32,64], index: 1, kind: input, shape index: {}]
  %s2 = inlined_call_operand.vmem [shape: f32[1,64], index: 2, kind: input, shape index: {}]
  %s3 = inlined_call_operand.hbm [shape: bf16[64,128], index: 3, kind: input, shape index: {}]
  %s4 = inlined_call_operand.vmem [shape: f32[1,128], index: 4, kind: input, shape index: {}]
  %s5 = inlined_call_operand.hbm [shape: f32[8,128], index: 5, kind: output, shape index: {}]
  %s6 = sld [smem:[#allocation0]]
  $region42: #{tpu_custom_call.1} parent=0
    _
  %s8 = ssub.s32 1, %s6
  %s9 = scalar_select 0, %s8, %s6
  $region1: #{tpu_custom_call.1} parent=0
    #allocation2 [shape = 'u8[2048]{0}', space=vmem, size = 0x800, scoped, tag = 'input window, operand 0, single buffered']
    #allocation3 [shape = 's32[1]{0}', space=sflag, size = 0x4, scoped, tag = 'scoped memory for tpu_custom_call.1']
    #allocation4 [shape = 's32[1]{0}', space=sflag, size = 0x4, scoped, tag = 'scoped memory for tpu_custom_call.1']
    #allocation5 [shape = 'u8[8192]{0}', space=vmem, size = 0x2000, scoped, tag = 'input window, operand 1, single buffered']
    #allocation6 [shape = 's32[1]{0}', space=sflag, size = 0x4, scoped, tag = 'scoped memory for tpu_custom_call.1']
    #allocation7 [shape = 'u8[16384]{0}', space=vmem, size = 0x4000, scoped, tag = 'input window, operand 3, single buffered']
    #allocation8 [shape = 'u8[4096]{0}', space=vmem, size = 0x1000, scoped, tag = 'output window, operand 0, single buffered']
    %10 = vsyncpa [#allocation3], 0
    %11 = vsyncpa [#allocation6], 0
    %12 = vsyncpa [#allocation4], 0
    // Predicated region
    $region2: #{tpu_custom_call.1} parent=1 // pred_check
      _
    $region3: #{tpu_custom_call.1} parent=1 // pred_check_branch
      %14 = sbr.rel (0) target = $region5
    $region4: #{tpu_custom_call.1} parent=1 // pred_region
      %s16 = ssub.s32 64, 64
      %17 = vsyncadd [#allocation3], %s16
      %s19 = sshll.u32 [#allocation2], 4
      %s20 = int_to_ptr.vmem [resolvable:$true] %s19
      %22 = dma.hbm_to_vmem [thread:$0]  %s0, 64, %s20, [#allocation3]
    $region5: #{tpu_custom_call.1} parent=1 // pred_fallthru
      _
    // Predicated region
    $region6: #{tpu_custom_call.1} parent=1 // pred_check
      _
    $region7: #{tpu_custom_call.1} parent=1 // pred_check_branch
      %24 = sbr.rel (0) target = $region9
    $region8: #{tpu_custom_call.1} parent=1 // pred_region
      %s26 = ssub.s32 256, 256
      %27 = vsyncadd [#allocation6], %s26
      %s28 = sshll.u32 [#allocation5], 4
      %s29 = int_to_ptr.vmem [resolvable:$true] %s28
      %34 = dma.hbm_to_vmem [thread:$0]  %s1, 256, %s29, [#allocation6], 64, 64, 4
    $region9: #{tpu_custom_call.1} parent=1 // pred_fallthru
      _
    // Predicated region
    $region10: #{tpu_custom_call.1} parent=1 // pred_check
      _
    $region11: #{tpu_custom_call.1} parent=1 // pred_check_branch
      %36 = sbr.rel (0) target = $region13
    $region12: #{tpu_custom_call.1} parent=1 // pred_region
      _
    $region13: #{tpu_custom_call.1} parent=1 // pred_fallthru
      _
    // Predicated region
    $region14: #{tpu_custom_call.1} parent=1 // pred_check
      _
    $region15: #{tpu_custom_call.1} parent=1 // pred_check_branch
      %38 = sbr.rel (0) target = $region17
    $region16: #{tpu_custom_call.1} parent=1 // pred_region
      %s40 = ssub.s32 512, 512
      %41 = vsyncadd [#allocation6], %s40
      %s42 = sshll.u32 [#allocation7], 4
      %s43 = int_to_ptr.vmem [resolvable:$true] %s42
      %48 = dma.hbm_to_vmem [thread:$0]  %s3, 512, %s43, [#allocation6], 64, 64, 4
    $region17: #{tpu_custom_call.1} parent=1 // pred_fallthru
      _
    // Predicated region
    $region18: #{tpu_custom_call.1} parent=1 // pred_check
      _
    $region19: #{tpu_custom_call.1} parent=1 // pred_check_branch
      %50 = sbr.rel (0) target = $region21
    $region20: #{tpu_custom_call.1} parent=1 // pred_region
      _
    $region21: #{tpu_custom_call.1} parent=1 // pred_fallthru
      _
    // Predicated region
    $region22: #{tpu_custom_call.1} parent=1 // pred_check
      _
    $region23: #{tpu_custom_call.1} parent=1 // pred_check_branch
      %52 = sbr.rel (0) target = $region25
    $region24: #{tpu_custom_call.1} parent=1 // pred_region
      %53 = dma.done [#allocation3], 64
    $region25: #{tpu_custom_call.1} parent=1 // pred_fallthru
      _
    // Predicated region
    $region26: #{tpu_custom_call.1} parent=1 // pred_check
      _
    $region27: #{tpu_custom_call.1} parent=1 // pred_check_branch
      %55 = sbr.rel (0) target = $region29
    $region28: #{tpu_custom_call.1} parent=1 // pred_region
      %56 = dma.done [#allocation6], 256
    $region29: #{tpu_custom_call.1} parent=1 // pred_fallthru
      _
    // Predicated region
    $region30: #{tpu_custom_call.1} parent=1 // pred_check
      _
    $region31: #{tpu_custom_call.1} parent=1 // pred_check_branch
      %58 = sbr.rel (0) target = $region33
    $region32: #{tpu_custom_call.1} parent=1 // pred_region
      %59 = dma.done [#allocation6], 512
    $region33: #{tpu_custom_call.1} parent=1 // pred_fallthru
      _
    %v61 = vld [vmem:[#allocation2] sm:$0xf]
    %v62 = vld [vmem:[#allocation5] sm:$0xf]
    %v63 = vld [vmem:[#allocation5 + $0x4] sm:$0xf]
    %v64 = vld [vmem:[#allocation5 + $0x8] sm:$0xf]
    %v65 = vld [vmem:[#allocation5 + $0xc] sm:$0xf]
    %v66 = vld [vmem:[%s2] sm:$0x1]
    %v68 = vlaneseq
    %v69 = vshrl.u32 %v68, 7
    %v70 = vsub.s32 0, %v69
    %v71 = vrot.slane %v66, %v70
    %v77 = vunpack.c.l.b16 %v62
    %v78 = vunpack.c.l.b16 %v63
    %v79 = vunpack.c.l.b16 %v64
    %v80 = vunpack.c.l.b16 %v65
    %v81 = vpack.c.b16 %v78, %v77
    %v82 = vpack.c.b16 %v80, %v79
    %vm85 = vcmask 261120
    %v87 = vsel %vm85, %v61, 0
    %89 = vmatprep.subr.bf16.mxu0 0
    %90 = vmatpush1.bf16.msra.mxu0 0
    %91 = vmatprep.subr.bf16.mxu0 0
    %92 = vmatpush1.bf16.msra.mxu0 0
    %93 = vmatprep.subr.bf16.mxu0 0
    %94 = vmatpush1.bf16.msra.mxu0 0
    %95 = vmatprep.subr.bf16.mxu0 0
    %96 = vmatpush1.bf16.msra.mxu0 0
    %97 = vmatprep.subr.bf16.mxu0 0
    %98 = vmatpush1.bf16.msra.mxu0 0
    %99 = vmatprep.subr.bf16.mxu0 0
    %100 = vmatpush1.bf16.msra.mxu0 0
    %101 = vmatprep.subr.bf16.mxu0 0
    %102 = vmatpush1.bf16.msra.mxu0 %v82
    %103 = vmatprep.subr.bf16.mxu0 0
    %104 = vmatpush1.bf16.msra.mxu0 %v81
    %105 = vmatprep.subr.bf16.mxu0 0
    %106 = vmatpush2.bf16.msra.mxu0 0
    %107 = vmatprep.subr.bf16.mxu0 0
    %108 = vmatpush2.bf16.msra.mxu0 0
    %109 = vmatprep.subr.bf16.mxu0 0
    %110 = vmatpush2.bf16.msra.mxu0 0
    %111 = vmatprep.subr.bf16.mxu0 0
    %112 = vmatpush2.bf16.msra.mxu0 0
    %113 = vmatprep.subr.bf16.mxu0 0
    %114 = vmatpush2.bf16.msra.mxu0 0
    %115 = vmatprep.subr.bf16.mxu0 0
    %116 = vmatpush2.bf16.msra.mxu0 0
    %117 = vmatprep.subr.bf16.mxu0 0
    %118 = vmatpush2.bf16.msra.mxu0 0
    %119 = vmatprep.subr.bf16.mxu0 0
    %120 = vmatpush2.bf16.msra.mxu0 0
    %121 = vmatprep.mubr.bf16.mxu0 0
    %122 = vmatmul.mubr.bf16.gmra.mxu0 %v87
    %v123 = vpop.f32.mrf.mxu0
    %v124 = vadd.f32 %v71, %v123
    %v125 = vpop.f32.mrf.mxu0
    %v126 = vpop.f32.mrf.mxu0
    %v127 = vpop.f32.mrf.mxu0
    %128 = vdwg.mxu0
    %v129 = vmax.f32 %v124, 0.0
    %v130 = vpack.c.bf16 %v129, %v129
    %v131 = vld [vmem:[#allocation7] sm:$0xf]
    %v132 = vld [vmem:[#allocation7 + $0x4] sm:$0xf]
    %v133 = vld [vmem:[#allocation7 + $0x8] sm:$0xf]
    %v134 = vld [vmem:[#allocation7 + $0xc] sm:$0xf]
    %v135 = vld [vmem:[#allocation7 + $0x10] sm:$0xf]
    %v136 = vld [vmem:[#allocation7 + $0x14] sm:$0xf]
    %v137 = vld [vmem:[#allocation7 + $0x18] sm:$0xf]
    %v138 = vld [vmem:[#allocation7 + $0x1c] sm:$0xf]
    %v139 = vld [vmem:[%s4] sm:$0x1]
    %v141 = vlaneseq
    %v142 = vshrl.u32 %v141, 7
    %v143 = vsub.s32 0, %v142
    %v144 = vrot.slane %v139, %v143
    %v154 = vunpack.c.l.b16 %v131
    %v155 = vunpack.c.l.b16 %v132
    %v156 = vunpack.c.l.b16 %v133
    %v157 = vunpack.c.l.b16 %v134
    %v158 = vunpack.c.l.b16 %v135
    %v159 = vunpack.c.l.b16 %v136
    %v160 = vunpack.c.l.b16 %v137
    %v161 = vunpack.c.l.b16 %v138
    %v162 = vpack.c.b16 %v155, %v154
    %v163 = vpack.c.b16 %v157, %v156
    %v164 = vpack.c.b16 %v159, %v158
    %v165 = vpack.c.b16 %v161, %v160
    %vm170 = vcmask 523264
    %v172 = vsel %vm170, %v130, 0
    %174 = vmatprep.subr.bf16.mxu0 0
    %175 = vmatpush1.bf16.msra.mxu0 0
    %176 = vmatprep.subr.bf16.mxu0 0
    %177 = vmatpush1.bf16.msra.mxu0 0
    %178 = vmatprep.subr.bf16.mxu0 0
    %179 = vmatpush1.bf16.msra.mxu0 0
    %180 = vmatprep.subr.bf16.mxu0 0
    %181 = vmatpush1.bf16.msra.mxu0 0
    %182 = vmatprep.subr.bf16.mxu0 0
    %183 = vmatpush1.bf16.msra.mxu0 %v165
    %184 = vmatprep.subr.bf16.mxu0 0
    %185 = vmatpush1.bf16.msra.mxu0 %v164
    %186 = vmatprep.subr.bf16.mxu0 0
    %187 = vmatpush1.bf16.msra.mxu0 %v163
    %188 = vmatprep.subr.bf16.mxu0 0
    %189 = vmatpush1.bf16.msra.mxu0 %v162
    %190 = vmatprep.subr.bf16.mxu0 0
    %191 = vmatpush2.bf16.msra.mxu0 0
    %192 = vmatprep.subr.bf16.mxu0 0
    %193 = vmatpush2.bf16.msra.mxu0 0
    %194 = vmatprep.subr.bf16.mxu0 0
    %195 = vmatpush2.bf16.msra.mxu0 0
    %196 = vmatprep.subr.bf16.mxu0 0
    %197 = vmatpush2.bf16.msra.mxu0 0
    %198 = vmatprep.subr.bf16.mxu0 0
    %199 = vmatpush2.bf16.msra.mxu0 0
    %200 = vmatprep.subr.bf16.mxu0 0
    %201 = vmatpush2.bf16.msra.mxu0 0
    %202 = vmatprep.subr.bf16.mxu0 0
    %203 = vmatpush2.bf16.msra.mxu0 0
    %204 = vmatprep.subr.bf16.mxu0 0
    %205 = vmatpush2.bf16.msra.mxu0 0
    %206 = vmatprep.mubr.bf16.mxu0 0
    %207 = vmatmul.mubr.bf16.gmra.mxu0 %v172
    %v208 = vpop.f32.mrf.mxu0
    %v209 = vadd.f32 %v144, %v208
    %v210 = vpop.f32.mrf.mxu0
    %v211 = vpop.f32.mrf.mxu0
    %v212 = vpop.f32.mrf.mxu0
    %213 = vdwg.mxu0
    %v214 = vmax.f32 %v209, 0.0
    %215 = vst [vmem:[#allocation8] sm:$0xff] %v214
    // Predicated region
    $region34: #{tpu_custom_call.1} parent=1 // pred_check
      _
    $region35: #{tpu_custom_call.1} parent=1 // pred_check_branch
      %217 = sbr.rel (0) target = $region37
    $region36: #{tpu_custom_call.1} parent=1 // pred_region
      %s219 = ssub.s32 128, 128
      %220 = vsyncadd [#allocation4], %s219
      %s222 = sshll.u32 [#allocation8], 4
      %s223 = int_to_ptr.vmem [resolvable:$true] %s222
      %225 = dma.vmem_to_hbm [thread:$0]  %s223, 128, %s5, [#allocation4]
    $region37: #{tpu_custom_call.1} parent=1 // pred_fallthru
      _
    // Predicated region
    $region38: #{tpu_custom_call.1} parent=1 // pred_check
      _
    $region39: #{tpu_custom_call.1} parent=1 // pred_check_branch
      %227 = sbr.rel (0) target = $region41
    $region40: #{tpu_custom_call.1} parent=1 // pred_region
      %228 = dma.done [#allocation4], 128
    $region41: #{tpu_custom_call.1} parent=1 // pred_fallthru
      _
    %229 = vsyncpa [#allocation3], 1
    %230 = vsyncpa [#allocation6], 1
    %231 = vsyncpa [#allocation4], 1

</llo_original>
